<compile_context>
chip_gen: v6e
topology: v6e:2x2x1
jax: 0.10.0
libtpu: 0.0.40
codegen_flags: <defaults>
</compile_context>

<pallas_src>
import functools

import jax
import jax.numpy as jnp
from jax import lax
from jax.experimental import pallas as pl
from jax.experimental.pallas import tpu as pltpu


def _round_up(x, m):
    return ((x + m - 1) // m) * m


def _graphormer_attn_kernel(x_ref, xT_ref, neg_ref, bias_ref,
                            wq_ref, wkv_ref, wo_ref, bo_ref,
                            o_ref,
                            kvT_ref, head_out_ref,
                            *, heads, dim_head, inner):
    """One grid step == one (batch, head) pair. b outer ("parallel"), h inner."""
    h = pl.program_id(1)
    d = dim_head

    # ---- hoisted K/V projection: one wide bf16 MXU matmul per batch element ----
    @pl.when(h == 0)
    def _():
        kvT_ref[...] = jnp.dot(
            wkv_ref[...], xT_ref[0],
            preferred_element_type=jnp.float32).astype(jnp.bfloat16)   # (2*inner, N)

    # Per-head K^T / V^T slices live on the sublane axis (safe dynamic pl.ds).
    k_t = kvT_ref[pl.ds(pl.multiple_of(h * d, d), d), :]               # (d, N)
    v_t = kvT_ref[pl.ds(pl.multiple_of(inner + h * d, d), d), :]       # (d, N)

    # Per-head Q projection (1/sqrt(d) scale pre-folded into the weights).
    q = jnp.dot(x_ref[0], wq_ref[h],
                preferred_element_type=jnp.float32).astype(jnp.bfloat16)  # (N, d)

    # scores: (N, d) @ (d, N) -> (N, N); f32 accumulation on the MXU.
    sim = jnp.dot(q, k_t, preferred_element_type=jnp.float32)
    sim = sim + bias_ref[0, 0]          # bf16 bias slab promotes to f32
    sim = sim + neg_ref[0]              # additive column mask (0 / -1e30), (1, N)

    # Numerically stable softmax; the divide goes to the EUP (approx reciprocal).
    sim = sim - jnp.max(sim, axis=-1, keepdims=True)
    p = jnp.exp(sim)
    attn = (p * pl.reciprocal(jnp.sum(p, axis=-1, keepdims=True), approx=True)
            ).astype(jnp.bfloat16)

    # out_h = attn @ v_h without materializing a transpose (trans_b dot_general).
    out_h = lax.dot_general(attn, v_t, (((1,), (1,)), ((), ())),
                            preferred_element_type=jnp.float32)        # (N, d)
    head_out_ref[h] = out_h.astype(jnp.bfloat16)

    # ---- deferred output projection: once per batch element, at the last head ----
    @pl.when(h == heads - 1)
    def _():
        acc = bo_ref[...]                                   # (1, Dop) f32, broadcasts
        for hh in range(heads):                             # static unroll, small H
            acc = acc + jnp.dot(head_out_ref[hh], wo_ref[hh],
                                preferred_element_type=jnp.float32)
        o_ref[0] = acc                                      # single lane-dense store


def graphormer_attention(x, mask, sim_bias, wq, wkv, wo, bo, *,
                         heads, dim_head, bias_layout="bijh"):
    """x: (B, N, Din) f32; mask: (B, N) bool; sim_bias: (B, N, N, H) f32.

    Weights in PyTorch nn.Linear layout:
      wq: (inner, Din)   -- to_q.weight
      wkv: (2*inner, Din) -- to_kv.weight (rows [0:inner]=K, [inner:2*inner]=V)
      wo: (Dout, inner), bo: (Dout,) -- to_out[0].weight / .bias
    Pass bias_layout="bhij" if the producer already emits (B, H, N, N).
    """
    B, N, Din = x.shape
    inner = heads * dim_head
    Dout = wo.shape[0]
    scale = float(dim_head) ** (-0.5)
    Dop = _round_up(Dout, 128)                      # lane-dense output width
    d = dim_head

    # ---- weight packing (one-time, weight-sized ops; all MXU operands bf16) ----
    wq_h = jnp.transpose((wq * scale).reshape(heads, d, Din),
                         (0, 2, 1)).astype(jnp.bfloat16)                # (H, Din, d)
    wkv_bf = wkv.astype(jnp.bfloat16)                                   # (2*inner, Din)
    wo_h = jnp.transpose(wo, (1, 0)).reshape(heads, d, Dout)
    wo_h = jnp.pad(wo_h, ((0, 0), (0, 0), (0, Dop - Dout))).astype(jnp.bfloat16)
    bo_p = jnp.pad(bo, (0, Dop - Dout)).reshape(1, Dop).astype(jnp.float32)

    # ---- activation-side prep ----
    x_bf = x.astype(jnp.bfloat16)
    xT_bf = jnp.swapaxes(x, 1, 2).astype(jnp.bfloat16)                  # (B, Din, N)
    # Additive column mask. Dropping the row term only changes fully-masked
    # query rows, which are meaningless in the PyTorch reference as well.
    neg = jnp.where(mask, 0.0, -1e30).astype(jnp.float32).reshape(B, 1, N)
    if bias_layout == "bijh":
        # Fused transpose + bf16 cast of the quadratic bias (single XLA op).
        bias_t = jnp.transpose(sim_bias, (0, 3, 1, 2)).astype(jnp.bfloat16)
    else:
        bias_t = sim_bias.astype(jnp.bfloat16)

    # ---- VMEM budget: double-buffered streams + resident weights + scratch ----
    stream_bytes = (2 * N * N            # bias slab (bf16), changes every (b, h)
                    + 2 * 2 * N * Din    # x + x^T (bf16), change per b
                    + 4 * N              # additive mask
                    + 4 * N * Dop)       # output block (f32)
    resident_bytes = (2 * heads * Din * d + 2 * 2 * inner * Din
                      + 2 * heads * d * Dop + 4 * Dop)
    scratch_bytes = 2 * (2 * inner) * N + 2 * heads * N * d
    temp_bytes = 4 * (3 * N * N + 2 * N * d + N * Dop)
    want = 2 * stream_bytes + 2 * resident_bytes + scratch_bytes + temp_bytes
    try:
        phys = pltpu.get_tpu_info().vmem_capacity_bytes
    except Exception:  # pragma: no cover - conservative fallback
        phys = 64 * 2 ** 20
    vmem_limit = int(min(int(phys * 0.75),            # headroom for Mosaic scratch
                         max(16 * 2 ** 20, int(want * 1.25))))

    kernel = functools.partial(_graphormer_attn_kernel,
                               heads=heads, dim_head=dim_head, inner=inner)

    out = pl.pallas_call(
        kernel,
        out_shape=jax.ShapeDtypeStruct((B, N, Dop), jnp.float32),
        grid_spec=pltpu.PrefetchScalarGridSpec(
            num_scalar_prefetch=0,
            grid=(B, heads),
            in_specs=[
                pl.BlockSpec((1, N, Din), lambda b, h: (b, 0, 0)),        # x (bf16)
                pl.BlockSpec((1, Din, N), lambda b, h: (b, 0, 0)),        # x^T (bf16)
                pl.BlockSpec((1, 1, N), lambda b, h: (b, 0, 0)),          # additive mask
                pl.BlockSpec((1, 1, N, N), lambda b, h: (b, h, 0, 0)),    # per-head bias (bf16)
                pl.BlockSpec((heads, Din, d), lambda b, h: (0, 0, 0)),    # Wq (resident)
                pl.BlockSpec((2 * inner, Din), lambda b, h: (0, 0)),      # Wkv (resident)
                pl.BlockSpec((heads, d, Dop), lambda b, h: (0, 0, 0)),    # Wo (resident)
                pl.BlockSpec((1, Dop), lambda b, h: (0, 0)),              # bo
            ],
            out_specs=pl.BlockSpec((1, N, Dop), lambda b, h: (b, 0, 0)),  # written at h==H-1
            scratch_shapes=[
                pltpu.VMEM((2 * inner, N), jnp.bfloat16),        # K^T | V^T, all heads
                pltpu.VMEM((heads, N, d), jnp.bfloat16),         # per-head attn @ V
            ],
        ),
        compiler_params=pltpu.CompilerParams(
            dimension_semantics=("parallel", "arbitrary"),
            vmem_limit_bytes=vmem_limit),
    )(x_bf, xT_bf, neg, bias_t, wq_h, wkv_bf, wo_h, bo_p)

    return out[..., :Dout] if Dop != Dout else out


def _reference(x, mask, sim_bias, wq, wkv, wo, bo, *, heads, dim_head):
    """Plain-JAX f32 replica of the PyTorch forward (for correctness check)."""
    B, N, _ = x.shape
    inner = heads * dim_head
    scale = float(dim_head) ** (-0.5)
    q = x @ wq.T
    kv = x @ wkv.T
    k, v = kv[..., :inner], kv[..., inner:]

    def split_heads(t):                                      # 'b n (h d) -> b h n d'
        return t.reshape(B, N, heads, dim_head).transpose(0, 2, 1, 3)

    q, k, v = map(split_heads, (q, k, v))
    sim = jnp.einsum('bhid,bhjd->bhij', q, k) * scale
    sim = sim + jnp.transpose(sim_bias, (0, 3, 1, 2))        # 'b i j h -> b h i j'
    m2 = (mask[:, :, None] & mask[:, None, :])[:, None]      # (B, 1, N, N)
    sim = jnp.where(m2, sim, jnp.finfo(jnp.float32).min)
    attn = jax.nn.softmax(sim, axis=-1)
    out = jnp.einsum('bhij,bhjd->bhid', attn, v)             # (B, H, N, d)
    out = out.transpose(0, 2, 1, 3).reshape(B, N, inner)
    return out @ wo.T + bo


if __name__ == "__main__":
    # Small, module-consistent shapes.
    B, N = 2, 8
    input_dim, output_dim = 32, 32
    heads, dim_head = 2, 16
    inner = heads * dim_head

    key = jax.random.PRNGKey(0)
    kx, kb, k1, k2, k3, k4 = jax.random.split(key, 6)

    x = jax.random.normal(kx, (B, N, input_dim), dtype=jnp.float32)
    sim_bias = 0.1 * jax.random.normal(kb, (B, N, N, heads), dtype=jnp.float32)
    # Deterministic token mask: batch 0 masks the last 2 tokens, batch 1 keeps all.
    mask = jnp.stack([
        jnp.arange(N) < (N - 2),
        jnp.ones((N,), dtype=bool),
    ], axis=0)

    # nn.Linear-like uniform init, PyTorch weight layout (out_features, in_features).
    def init_w(k, shape, fan_in):
        bound = 1.0 / (fan_in ** 0.5)
        return jax.random.uniform(k, shape, jnp.float32, -bound, bound)

    wq = init_w(k1, (inner, input_dim), input_dim)        # to_q.weight
    wkv = init_w(k2, (2 * inner, input_dim), input_dim)   # to_kv.weight
    wo = init_w(k3, (output_dim, inner), inner)           # to_out[0].weight
    bo = init_w(k4, (output_dim,), inner)                 # to_out[0].bias

    out = graphormer_attention(x, mask, sim_bias, wq, wkv, wo, bo,
                               heads=heads, dim_head=dim_head)
    out = jax.block_until_ready(out)

    ref = _reference(x, mask, sim_bias, wq, wkv, wo, bo,
                     heads=heads, dim_head=dim_head)
    assert out.shape == (B, N, output_dim)
    # Compare only valid (unmasked) query rows: masked rows are garbage in the
    # reference too (uniform attention) and the kernel uses a column-only mask.
    # Tolerance accounts for bf16 MXU operands + approx reciprocal.
    valid = mask[:, :, None]
    assert jnp.allclose(jnp.where(valid, out, 0.0),
                        jnp.where(valid, ref, 0.0),
                        rtol=3e-2, atol=3e-2), "mismatch vs reference"

    print("KERNEL_OK")
</pallas_src>

<mosaic_0001>
module attributes {stable_mosaic.version = 11 : i64} {
  func.func @_graphormer_attn_kernel(%arg0: i32, %arg1: i32, %arg2: memref<1x8x32xbf16, #tpu.memory_space<vmem>>, %arg3: memref<1x32x8xbf16, #tpu.memory_space<vmem>>, %arg4: memref<1x1x8xf32, #tpu.memory_space<vmem>>, %arg5: memref<1x1x8x8xbf16, #tpu.memory_space<vmem>>, %arg6: memref<2x32x16xbf16, #tpu.memory_space<vmem>>, %arg7: memref<64x32xbf16, #tpu.memory_space<vmem>>, %arg8: memref<2x16x128xbf16, #tpu.memory_space<vmem>>, %arg9: memref<1x128xf32, #tpu.memory_space<vmem>>, %arg10: memref<1x8x128xf32, #tpu.memory_space<vmem>>, %arg11: memref<64x8xbf16, #tpu.memory_space<vmem>>, %arg12: memref<2x8x16xbf16, #tpu.memory_space<vmem>>) attributes {dimension_semantics = [#tpu.dimension_semantics<parallel>, #tpu.dimension_semantics<arbitrary>], iteration_bounds = array<i64: 2, 2>, scalar_prefetch = 0 : i64, scratch_operands = 2 : i64, tpu.core_type = #tpu.core_type<tc>, window_params = [{transform_indices = @transform_0, window_bounds = array<i64: 1, 8, 32>}, {transform_indices = @transform_1, window_bounds = array<i64: 1, 32, 8>}, {transform_indices = @transform_2, window_bounds = array<i64: 1, 1, 8>}, {transform_indices = @transform_3, window_bounds = array<i64: 1, 1, 8, 8>}, {pipeline_mode = #tpu.pipeline_mode<synchronous>, transform_indices = @transform_4, window_bounds = array<i64: 2, 32, 16>}, {pipeline_mode = #tpu.pipeline_mode<synchronous>, transform_indices = @transform_5, window_bounds = array<i64: 64, 32>}, {pipeline_mode = #tpu.pipeline_mode<synchronous>, transform_indices = @transform_6, window_bounds = array<i64: 2, 16, 128>}, {pipeline_mode = #tpu.pipeline_mode<synchronous>, transform_indices = @transform_7, window_bounds = array<i64: 1, 128>}, {transform_indices = @transform_8, window_bounds = array<i64: 1, 8, 128>}]} {
    %c0_i32 = arith.constant 0 : i32
    %0 = arith.cmpi eq, %arg1, %c0_i32 : i32
    %1 = arith.extui %0 : i1 to i32
    %c0_i32_0 = arith.constant 0 : i32
    %2 = arith.cmpi ne, %1, %c0_i32_0 : i32
    scf.if %2 {
      %c0_22 = arith.constant 0 : index
      %c0_23 = arith.constant 0 : index
      %48 = vector.load %arg7[%c0_22, %c0_23] : memref<64x32xbf16, #tpu.memory_space<vmem>>, vector<64x32xbf16>
      %c0_24 = arith.constant 0 : index
      %c0_25 = arith.constant 0 : index
      %c0_26 = arith.constant 0 : index
      %49 = vector.load %arg3[%c0_24, %c0_25, %c0_26] : memref<1x32x8xbf16, #tpu.memory_space<vmem>>, vector<1x32x8xbf16>
      %50 = vector.shape_cast %49 : vector<1x32x8xbf16> to vector<32x8xbf16>
      %cst_27 = arith.constant dense<0.000000e+00> : vector<64x8xf32>
      %51 = tpu.matmul %48, %50, %cst_27 {dimension_numbers = #tpu.dot_dimension_numbers<[1], [0], [0], [1], [0, 0, 1, 1], [], []>} : vector<64x32xbf16>, vector<32x8xbf16>, vector<64x8xf32> -> vector<64x8xf32>
      %52 = arith.truncf %51 : vector<64x8xf32> to vector<64x8xbf16>
      %c0_28 = arith.constant 0 : index
      %c0_29 = arith.constant 0 : index
      %53 = vector.load %arg11[%c0_28, %c0_29] : memref<64x8xbf16, #tpu.memory_space<vmem>>, vector<64x8xbf16>
      tpu.vector_store %arg11[%c0_28, %c0_29], %52 {strides = array<i32>} : memref<64x8xbf16, #tpu.memory_space<vmem>>, vector<64x8xbf16>,
    } else {
    }
    %c16_i32 = arith.constant 16 : i32
    %3 = arith.muli %arg1, %c16_i32 : i32
    %4 = tpu.assume_multiple %3, 16 : i32
    %5 = arith.index_cast %4 : i32 to index
    %c0 = arith.constant 0 : index
    %6 = vector.load %arg11[%5, %c0] : memref<64x8xbf16, #tpu.memory_space<vmem>>, vector<16x8xbf16>
    %c16_i32_1 = arith.constant 16 : i32
    %7 = arith.muli %arg1, %c16_i32_1 : i32
    %c32_i32 = arith.constant 32 : i32
    %8 = arith.addi %c32_i32, %7 : i32
    %9 = tpu.assume_multiple %8, 16 : i32
    %10 = arith.index_cast %9 : i32 to index
    %c0_2 = arith.constant 0 : index
    %11 = vector.load %arg11[%10, %c0_2] : memref<64x8xbf16, #tpu.memory_space<vmem>>, vector<16x8xbf16>
    %c0_3 = arith.constant 0 : index
    %c0_4 = arith.constant 0 : index
    %c0_5 = arith.constant 0 : index
    %12 = vector.load %arg2[%c0_3, %c0_4, %c0_5] : memref<1x8x32xbf16, #tpu.memory_space<vmem>>, vector<1x8x32xbf16>
    %13 = vector.shape_cast %12 : vector<1x8x32xbf16> to vector<8x32xbf16>
    %14 = arith.index_cast %arg1 : i32 to index
    %c0_6 = arith.constant 0 : index
    %c0_7 = arith.constant 0 : index
    %15 = vector.load %arg6[%14, %c0_6, %c0_7] : memref<2x32x16xbf16, #tpu.memory_space<vmem>>, vector<1x32x16xbf16>
    %16 = vector.shape_cast %15 : vector<1x32x16xbf16> to vector<32x16xbf16>
    %cst = arith.constant dense<0.000000e+00> : vector<8x16xf32>
    %17 = tpu.matmul %13, %16, %cst {dimension_numbers = #tpu.dot_dimension_numbers<[1], [0], [0], [1], [0, 0, 1, 1], [], []>} : vector<8x32xbf16>, vector<32x16xbf16>, vector<8x16xf32> -> vector<8x16xf32>
    %18 = arith.truncf %17 : vector<8x16xf32> to vector<8x16xbf16>
    %cst_8 = arith.constant dense<0.000000e+00> : vector<8x8xf32>
    %19 = tpu.matmul %18, %6, %cst_8 {dimension_numbers = #tpu.dot_dimension_numbers<[1], [0], [0], [1], [0, 0, 1, 1], [], []>} : vector<8x16xbf16>, vector<16x8xbf16>, vector<8x8xf32> -> vector<8x8xf32>
    %c0_9 = arith.constant 0 : index
    %c0_10 = arith.constant 0 : index
    %c0_11 = arith.constant 0 : index
    %c0_12 = arith.constant 0 : index
    %20 = vector.load %arg5[%c0_9, %c0_10, %c0_11, %c0_12] : memref<1x1x8x8xbf16, #tpu.memory_space<vmem>>, vector<1x1x8x8xbf16>
    %21 = vector.shape_cast %20 : vector<1x1x8x8xbf16> to vector<8x8xbf16>
    %22 = arith.extf %21 : vector<8x8xbf16> to vector<8x8xf32>
    %23 = arith.addf %19, %22 : vector<8x8xf32>
    %c0_13 = arith.constant 0 : index
    %c0_14 = arith.constant 0 : index
    %c0_15 = arith.constant 0 : index
    %24 = vector.load %arg4[%c0_13, %c0_14, %c0_15] : memref<1x1x8xf32, #tpu.memory_space<vmem>>, vector<1x1x8xf32>
    %25 = vector.shape_cast %24 : vector<1x1x8xf32> to vector<1x8xf32>
    %26 = vector.broadcast %25 : vector<1x8xf32> to vector<8x8xf32>
    %27 = arith.addf %23, %26 : vector<8x8xf32>
    %cst_16 = arith.constant dense<0xFF800000> : vector<8xf32>
    %28 = vector.multi_reduction <maximumf>, %27, %cst_16 [1] : vector<8x8xf32> to vector<8xf32>
    %29 = vector.shape_cast %28 : vector<8xf32> to vector<8x1xf32>
    %30 = vector.broadcast %29 : vector<8x1xf32> to vector<8x8xf32>
    %31 = arith.subf %27, %30 : vector<8x8xf32>
    %32 = math.exp %31 : vector<8x8xf32>
    %cst_17 = arith.constant dense<0.000000e+00> : vector<8xf32>
    %33 = vector.multi_reduction <add>, %32, %cst_17 [1] : vector<8x8xf32> to vector<8xf32>
    %34 = vector.shape_cast %33 : vector<8xf32> to vector<8x1xf32>
    %35 = tpu.reciprocal %34 {approx = true} : vector<8x1xf32> -> vector<8x1xf32>
    %36 = vector.broadcast %35 : vector<8x1xf32> to vector<8x8xf32>
    %37 = arith.mulf %32, %36 : vector<8x8xf32>
    %38 = arith.truncf %37 : vector<8x8xf32> to vector<8x8xbf16>
    %cst_18 = arith.constant dense<0.000000e+00> : vector<8x16xf32>
    %39 = tpu.matmul %38, %11, %cst_18 {dimension_numbers = #tpu.dot_dimension_numbers<[1], [1], [0], [0], [0, 0, 1, 0], [], []>} : vector<8x8xbf16>, vector<16x8xbf16>, vector<8x16xf32> -> vector<8x16xf32>
    %40 = arith.truncf %39 : vector<8x16xf32> to vector<8x16xbf16>
    %41 = arith.index_cast %arg1 : i32 to index
    %c0_19 = arith.constant 0 : index
    %c0_20 = arith.constant 0 : index
    %42 = vector.load %arg12[%41, %c0_19, %c0_20] : memref<2x8x16xbf16, #tpu.memory_space<vmem>>, vector<1x8x16xbf16>
    %43 = vector.shape_cast %42 : vector<1x8x16xbf16> to vector<8x16xbf16>
    %44 = vector.shape_cast %40 : vector<8x16xbf16> to vector<1x8x16xbf16>
    tpu.vector_store %arg12[%41, %c0_19, %c0_20], %44 {strides = array<i32>} : memref<2x8x16xbf16, #tpu.memory_space<vmem>>, vector<1x8x16xbf16>,
    %c1_i32 = arith.constant 1 : i32
    %45 = arith.cmpi eq, %arg1, %c1_i32 : i32
    %46 = arith.extui %45 : i1 to i32
    %c0_i32_21 = arith.constant 0 : i32
    %47 = arith.cmpi ne, %46, %c0_i32_21 : i32
    scf.if %47 {
      %c0_22 = arith.constant 0 : index
      %c0_23 = arith.constant 0 : index
      %48 = vector.load %arg9[%c0_22, %c0_23] : memref<1x128xf32, #tpu.memory_space<vmem>>, vector<1x128xf32>
      %c0_24 = arith.constant 0 : index
      %c0_25 = arith.constant 0 : index
      %c0_26 = arith.constant 0 : index
      %49 = vector.load %arg12[%c0_24, %c0_25, %c0_26] : memref<2x8x16xbf16, #tpu.memory_space<vmem>>, vector<1x8x16xbf16>
      %50 = vector.shape_cast %49 : vector<1x8x16xbf16> to vector<8x16xbf16>
      %c0_27 = arith.constant 0 : index
      %c0_28 = arith.constant 0 : index
      %c0_29 = arith.constant 0 : index
      %51 = vector.load %arg8[%c0_27, %c0_28, %c0_29] : memref<2x16x128xbf16, #tpu.memory_space<vmem>>, vector<1x16x128xbf16>
      %52 = vector.shape_cast %51 : vector<1x16x128xbf16> to vector<16x128xbf16>
      %cst_30 = arith.constant dense<0.000000e+00> : vector<8x128xf32>
      %53 = tpu.matmul %50, %52, %cst_30 {dimension_numbers = #tpu.dot_dimension_numbers<[1], [0], [0], [1], [0, 0, 1, 1], [], []>} : vector<8x16xbf16>, vector<16x128xbf16>, vector<8x128xf32> -> vector<8x128xf32>
      %54 = vector.broadcast %48 : vector<1x128xf32> to vector<8x128xf32>
      %55 = arith.addf %54, %53 : vector<8x128xf32>
      %c1 = arith.constant 1 : index
      %c0_31 = arith.constant 0 : index
      %c0_32 = arith.constant 0 : index
      %56 = vector.load %arg12[%c1, %c0_31, %c0_32] : memref<2x8x16xbf16, #tpu.memory_space<vmem>>, vector<1x8x16xbf16>
      %57 = vector.shape_cast %56 : vector<1x8x16xbf16> to vector<8x16xbf16>
      %c1_33 = arith.constant 1 : index
      %c0_34 = arith.constant 0 : index
      %c0_35 = arith.constant 0 : index
      %58 = vector.load %arg8[%c1_33, %c0_34, %c0_35] : memref<2x16x128xbf16, #tpu.memory_space<vmem>>, vector<1x16x128xbf16>
      %59 = vector.shape_cast %58 : vector<1x16x128xbf16> to vector<16x128xbf16>
      %cst_36 = arith.constant dense<0.000000e+00> : vector<8x128xf32>
      %60 = tpu.matmul %57, %59, %cst_36 {dimension_numbers = #tpu.dot_dimension_numbers<[1], [0], [0], [1], [0, 0, 1, 1], [], []>} : vector<8x16xbf16>, vector<16x128xbf16>, vector<8x128xf32> -> vector<8x128xf32>
      %61 = arith.addf %55, %60 : vector<8x128xf32>
      %c0_37 = arith.constant 0 : index
      %c0_38 = arith.constant 0 : index
      %c0_39 = arith.constant 0 : index
      %62 = vector.load %arg10[%c0_37, %c0_38, %c0_39] : memref<1x8x128xf32, #tpu.memory_space<vmem>>, vector<1x8x128xf32>
      %63 = vector.shape_cast %62 : vector<1x8x128xf32> to vector<8x128xf32>
      %64 = vector.shape_cast %61 : vector<8x128xf32> to vector<1x8x128xf32>
      tpu.vector_store %arg10[%c0_37, %c0_38, %c0_39], %64 {strides = array<i32>} : memref<1x8x128xf32, #tpu.memory_space<vmem>>, vector<1x8x128xf32>,
    } else {
    }
    return
  }
  func.func @transform_0(%arg0: i32, %arg1: i32) -> (i32, i32, i32) {
    %c0_i32 = arith.constant 0 : i32
    %c0_i32_0 = arith.constant 0 : i32
    %c0_i32_1 = arith.constant 0 : i32
    return %arg0, %c0_i32, %c0_i32_0 : i32, i32, i32
  }
  func.func @transform_1(%arg0: i32, %arg1: i32) -> (i32, i32, i32) {
    %c0_i32 = arith.constant 0 : i32
    %c0_i32_0 = arith.constant 0 : i32
    %c0_i32_1 = arith.constant 0 : i32
    return %arg0, %c0_i32, %c0_i32_0 : i32, i32, i32
  }
  func.func @transform_2(%arg0: i32, %arg1: i32) -> (i32, i32, i32) {
    %c0_i32 = arith.constant 0 : i32
    %c0_i32_0 = arith.constant 0 : i32
    %c0_i32_1 = arith.constant 0 : i32
    return %arg0, %c0_i32, %c0_i32_0 : i32, i32, i32
  }
  func.func @transform_3(%arg0: i32, %arg1: i32) -> (i32, i32, i32, i32) {
    %c0_i32 = arith.constant 0 : i32
    %c0_i32_0 = arith.constant 0 : i32
    %c0_i32_1 = arith.constant 0 : i32
    return %arg0, %arg1, %c0_i32, %c0_i32_0 : i32, i32, i32, i32
  }
  func.func @transform_4(%arg0: i32, %arg1: i32) -> (i32, i32, i32) {
    %c0_i32 = arith.constant 0 : i32
    %c0_i32_0 = arith.constant 0 : i32
    %c0_i32_1 = arith.constant 0 : i32
    %c0_i32_2 = arith.constant 0 : i32
    return %c0_i32, %c0_i32_0, %c0_i32_1 : i32, i32, i32
  }
  func.func @transform_5(%arg0: i32, %arg1: i32) -> (i32, i32) {
    %c0_i32 = arith.constant 0 : i32
    %c0_i32_0 = arith.constant 0 : i32
    %c0_i32_1 = arith.constant 0 : i32
    return %c0_i32, %c0_i32_0 : i32, i32
  }
  func.func @transform_6(%arg0: i32, %arg1: i32) -> (i32, i32, i32) {
    %c0_i32 = arith.constant 0 : i32
    %c0_i32_0 = arith.constant 0 : i32
    %c0_i32_1 = arith.constant 0 : i32
    %c0_i32_2 = arith.constant 0 : i32
    return %c0_i32, %c0_i32_0, %c0_i32_1 : i32, i32, i32
  }
  func.func @transform_7(%arg0: i32, %arg1: i32) -> (i32, i32) {
    %c0_i32 = arith.constant 0 : i32
    %c0_i32_0 = arith.constant 0 : i32
    %c0_i32_1 = arith.constant 0 : i32
    return %c0_i32, %c0_i32_0 : i32, i32
  }
  func.func @transform_8(%arg0: i32, %arg1: i32) -> (i32, i32, i32) {
    %c0_i32 = arith.constant 0 : i32
    %c0_i32_0 = arith.constant 0 : i32
    %c0_i32_1 = arith.constant 0 : i32
    return %arg0, %c0_i32, %c0_i32_0 : i32, i32, i32
  }
}

</mosaic_0001>

<llo_original>
// kernel: tpu_custom_call.1
$region0: #{tpu_custom_call.1}
  #allocation0 [shape = 'u32[]', space=smem, size = 0x4, offset = 0x4, fixed_abs, tag = 'smem constant byte address 0x4 - core index']
  #allocation1 [shape = 'u32[144,128]{1,0:T(1,128)}', space=vmem, size = 0x12000, scoped, tag = 'internal scratch']
  #allocation2 [shape = 'bf16[64,8]{1,0:T(8,128)(2,1)}', space=vmem, size = 0x4000, scoped, tag = 'scratch operand']
  #allocation3 [shape = 'bf16[2,8,16]{2,1,0:T(8,128)(2,1)}', space=vmem, size = 0x1000, scoped, tag = 'scratch operand']
  %s0 = inlined_call_operand.vmem [shape: bf16[2,8,32], index: 0, kind: input, shape index: {}]
  %s1 = inlined_call_operand.vmem [shape: bf16[2,32,8], index: 1, kind: input, shape index: {}]
  %s2 = inlined_call_operand.vmem [shape: f32[2,1,8], index: 2, kind: input, shape index: {}]
  %s3 = inlined_call_operand.vmem [shape: bf16[2,2,8,8], index: 3, kind: input, shape index: {}]
  %s4 = inlined_call_operand.vmem [shape: bf16[2,32,16], index: 4, kind: input, shape index: {}]
  %s5 = inlined_call_operand.vmem [shape: bf16[64,32], index: 5, kind: input, shape index: {}]
  %s6 = inlined_call_operand.vmem [shape: bf16[2,16,128], index: 6, kind: input, shape index: {}]
  %s7 = inlined_call_operand.vmem [shape: f32[1,128], index: 7, kind: input, shape index: {}]
  %s8 = inlined_call_operand.hbm [shape: f32[2,8,128], index: 8, kind: output, shape index: {}]
  %s9 = sld [smem:[#allocation0]]
  $region73: #{tpu_custom_call.1} parent=0
    _
  %s11 = ssub.s32 1, %s9
  %s12 = scalar_select 0, %s11, %s9
  $region1: #{tpu_custom_call.1} parent=0
    #allocation4 [shape = 'u8[8192]{0}', space=vmem, size = 0x2000, scoped, tag = 'output window, operand 0']
    #allocation5 [shape = 's32[2]{0}', space=sflag, size = 0x8, scoped, tag = 'scoped memory for tpu_custom_call.1']
    %13 = vsyncpa [#allocation5], 0
    %s14 = scalar_lea.sflag [#allocation5], 1
    %15 = vsyncpa %s14, 0
    loop: start=0, step=1, limit=6
    $region2: #{tpu_custom_call.1} parent=1 // loop_pre_header
      _
    $region3: #{tpu_custom_call.1} parent=1 // loop_header
      %s17 = sphi 0, %s21
      %p18 = scmp.ge.s32.totalorder %s17, 6
      %s24 = sphi 0, %s36
      %s25 = sphi 0, %s32
      %s26 = sphi 0, %s24
      %s27 = sphi 0, %s25
      %s28 = sphi 0, %s26
      %s29 = sphi 0, %s27
      %s39 = sphi 0, %s41
      %s42 = sphi 0, %s39
      %s43 = sphi 0, %s42
      %s59 = sphi 0, %s43
      %s65 = sphi 0, %s67
      %s68 = sphi 0, %s65
      %s69 = sphi 0, %s68
      %s85 = sphi 0, %s69
      %s91 = sphi 0, %s93
      %s94 = sphi 0, %s91
      %s95 = sphi 0, %s94
      %s111 = sphi 0, %s95
      %s119 = sphi 0, %s121
      %s122 = sphi 0, %s119
      %s123 = sphi 0, %s122
      %s139 = sphi 0, %s123
      %s143 = sphi 0, %s143
      %s145 = sphi 0, %s143
      %s146 = sphi 0, %s145
      %s160 = sphi 0, %s146
      %s164 = sphi 0, %s164
      %s166 = sphi 0, %s164
      %s167 = sphi 0, %s166
      %s181 = sphi 0, %s167
      %s185 = sphi 0, %s185
      %s187 = sphi 0, %s185
      %s188 = sphi 0, %s187
      %s202 = sphi 0, %s188
      %s206 = sphi 0, %s206
      %s208 = sphi 0, %s206
      %s209 = sphi 0, %s208
      %s223 = sphi 0, %s209
      %s229 = sphi 0, %s231
      %s232 = sphi 0, %s229
      %s233 = sphi 0, %s232
      %s249 = sphi 0, %s233
    $region4: #{tpu_custom_call.1} parent=1 // loop_header_branch
      %20 = sbr.rel (%p18) target = $region8
    $region5: #{tpu_custom_call.1} parent=1 // loop_body
      %s22 = ssub.s32 %s17, 1
      %s23 = ssub.s32 %s17, 2
      %s30 = sadd.s32 1, %s25
      %p31 = scmp.ge.s32.totalorder %s30, 2
      %s32 = scalar_select %p31, 0, %s30
      %s33 = sadd.s32 1, %s24
      %s34 = scalar_select %p31, %s33, %s24
      %p35 = scmp.ge.s32.totalorder %s34, 2
      %s36 = scalar_select %p35, 0, %s34
      %s37 = ssub.s32 %s24, %s36
      %p38 = scmp.eq.s32.totalorder %s37, 0
      %s40 = sadd.s32 %s39, 1
      %s41 = scalar_select %p38, %s39, %s40
      %p44 = pneg %p38
      %p45 = scmp.eq.s32.totalorder %s17, 3
      %p46 = por %p44, %p45
      %p47 = scmp.ne.s32.totalorder %s39, %s42
      %p48 = scmp.eq.s32.totalorder %s17, 0
      %p49 = por %p47, %p48
      %p50 = scmp.ne.s32.totalorder %s39, %s42
      %p51 = scmp.eq.s32.totalorder %s22, 3
      %p52 = por %p50, %p51
      %p53 = scmp.ne.s32.totalorder %s42, %s43
      %p54 = scmp.eq.s32.totalorder %s22, 0
      %p55 = por %p53, %p54
      %p56 = scmp.ne.s32.totalorder %s42, %s43
      %p57 = scmp.eq.s32.totalorder %s23, 3
      %p58 = por %p56, %p57
      %p60 = scmp.ne.s32.totalorder %s43, %s59
      %p61 = scmp.eq.s32.totalorder %s23, 0
      %p62 = por %p60, %p61
      %s63 = ssub.s32 %s24, %s36
      %p64 = scmp.eq.s32.totalorder %s63, 0
      %s66 = sadd.s32 %s65, 1
      %s67 = scalar_select %p64, %s65, %s66
      %p70 = pneg %p64
      %p71 = scmp.eq.s32.totalorder %s17, 3
      %p72 = por %p70, %p71
      %p73 = scmp.ne.s32.totalorder %s65, %s68
      %p74 = scmp.eq.s32.totalorder %s17, 0
      %p75 = por %p73, %p74
      %p76 = scmp.ne.s32.totalorder %s65, %s68
      %p77 = scmp.eq.s32.totalorder %s22, 3
      %p78 = por %p76, %p77
      %p79 = scmp.ne.s32.totalorder %s68, %s69
      %p80 = scmp.eq.s32.totalorder %s22, 0
      %p81 = por %p79, %p80
      %p82 = scmp.ne.s32.totalorder %s68, %s69
      %p83 = scmp.eq.s32.totalorder %s23, 3
      %p84 = por %p82, %p83
      %p86 = scmp.ne.s32.totalorder %s69, %s85
      %p87 = scmp.eq.s32.totalorder %s23, 0
      %p88 = por %p86, %p87
      %s89 = ssub.s32 %s24, %s36
      %p90 = scmp.eq.s32.totalorder %s89, 0
      %s92 = sadd.s32 %s91, 1
      %s93 = scalar_select %p90, %s91, %s92
      %p96 = pneg %p90
      %p97 = scmp.eq.s32.totalorder %s17, 3
      %p98 = por %p96, %p97
      %p99 = scmp.ne.s32.totalorder %s91, %s94
      %p100 = scmp.eq.s32.totalorder %s17, 0
      %p101 = por %p99, %p100
      %p102 = scmp.ne.s32.totalorder %s91, %s94
      %p103 = scmp.eq.s32.totalorder %s22, 3
      %p104 = por %p102, %p103
      %p105 = scmp.ne.s32.totalorder %s94, %s95
      %p106 = scmp.eq.s32.totalorder %s22, 0
      %p107 = por %p105, %p106
      %p108 = scmp.ne.s32.totalorder %s94, %s95
      %p109 = scmp.eq.s32.totalorder %s23, 3
      %p110 = por %p108, %p109
      %p112 = scmp.ne.s32.totalorder %s95, %s111
      %p113 = scmp.eq.s32.totalorder %s23, 0
      %p114 = por %p112, %p113
      %s115 = ssub.s32 %s24, %s36
      %s116 = ssub.s32 %s25, %s32
      %s117 = sor.u32 %s115, %s116
      %p118 = scmp.eq.s32.totalorder %s117, 0
      %s120 = sadd.s32 %s119, 1
      %s121 = scalar_select %p118, %s119, %s120
      %p124 = pneg %p118
      %p125 = scmp.eq.s32.totalorder %s17, 3
      %p126 = por %p124, %p125
      %p127 = scmp.ne.s32.totalorder %s119, %s122
      %p128 = scmp.eq.s32.totalorder %s17, 0
      %p129 = por %p127, %p128
      %p130 = scmp.ne.s32.totalorder %s119, %s122
      %p131 = scmp.eq.s32.totalorder %s22, 3
      %p132 = por %p130, %p131
      %p133 = scmp.ne.s32.totalorder %s122, %s123
      %p134 = scmp.eq.s32.totalorder %s22, 0
      %p135 = por %p133, %p134
      %p136 = scmp.ne.s32.totalorder %s122, %s123
      %p137 = scmp.eq.s32.totalorder %s23, 3
      %p138 = por %p136, %p137
      %p140 = scmp.ne.s32.totalorder %s123, %s139
      %p141 = scmp.eq.s32.totalorder %s23, 0
      %p142 = por %p140, %p141
      %s144 = sadd.s32 %s143, 1
      %p147 = scmp.eq.s32.totalorder %s17, 3
      %p148 = scmp.ne.s32.totalorder %s143, %s145
      %p149 = scmp.eq.s32.totalorder %s17, 0
      %p150 = por %p148, %p149
      %p151 = scmp.ne.s32.totalorder %s143, %s145
      %p152 = scmp.eq.s32.totalorder %s22, 3
      %p153 = por %p151, %p152
      %p154 = scmp.ne.s32.totalorder %s145, %s146
      %p155 = scmp.eq.s32.totalorder %s22, 0
      %p156 = por %p154, %p155
      %p157 = scmp.ne.s32.totalorder %s145, %s146
      %p158 = scmp.eq.s32.totalorder %s23, 3
      %p159 = por %p157, %p158
      %p161 = scmp.ne.s32.totalorder %s146, %s160
      %p162 = scmp.eq.s32.totalorder %s23, 0
      %p163 = por %p161, %p162
      %s165 = sadd.s32 %s164, 1
      %p168 = scmp.eq.s32.totalorder %s17, 3
      %p169 = scmp.ne.s32.totalorder %s164, %s166
      %p170 = scmp.eq.s32.totalorder %s17, 0
      %p171 = por %p169, %p170
      %p172 = scmp.ne.s32.totalorder %s164, %s166
      %p173 = scmp.eq.s32.totalorder %s22, 3
      %p174 = por %p172, %p173
      %p175 = scmp.ne.s32.totalorder %s166, %s167
      %p176 = scmp.eq.s32.totalorder %s22, 0
      %p177 = por %p175, %p176
      %p178 = scmp.ne.s32.totalorder %s166, %s167
      %p179 = scmp.eq.s32.totalorder %s23, 3
      %p180 = por %p178, %p179
      %p182 = scmp.ne.s32.totalorder %s167, %s181
      %p183 = scmp.eq.s32.totalorder %s23, 0
      %p184 = por %p182, %p183
      %s186 = sadd.s32 %s185, 1
      %p189 = scmp.eq.s32.totalorder %s17, 3
      %p190 = scmp.ne.s32.totalorder %s185, %s187
      %p191 = scmp.eq.s32.totalorder %s17, 0
      %p192 = por %p190, %p191
      %p193 = scmp.ne.s32.totalorder %s185, %s187
      %p194 = scmp.eq.s32.totalorder %s22, 3
      %p195 = por %p193, %p194
      %p196 = scmp.ne.s32.totalorder %s187, %s188
      %p197 = scmp.eq.s32.totalorder %s22, 0
      %p198 = por %p196, %p197
      %p199 = scmp.ne.s32.totalorder %s187, %s188
      %p200 = scmp.eq.s32.totalorder %s23, 3
      %p201 = por %p199, %p200
      %p203 = scmp.ne.s32.totalorder %s188, %s202
      %p204 = scmp.eq.s32.totalorder %s23, 0
      %p205 = por %p203, %p204
      %s207 = sadd.s32 %s206, 1
      %p210 = scmp.eq.s32.totalorder %s17, 3
      %p211 = scmp.ne.s32.totalorder %s206, %s208
      %p212 = scmp.eq.s32.totalorder %s17, 0
      %p213 = por %p211, %p212
      %p214 = scmp.ne.s32.totalorder %s206, %s208
      %p215 = scmp.eq.s32.totalorder %s22, 3
      %p216 = por %p214, %p215
      %p217 = scmp.ne.s32.totalorder %s208, %s209
      %p218 = scmp.eq.s32.totalorder %s22, 0
      %p219 = por %p217, %p218
      %p220 = scmp.ne.s32.totalorder %s208, %s209
      %p221 = scmp.eq.s32.totalorder %s23, 3
      %p222 = por %p220, %p221
      %p224 = scmp.ne.s32.totalorder %s209, %s223
      %p225 = scmp.eq.s32.totalorder %s23, 0
      %p226 = por %p224, %p225
      %s227 = ssub.s32 %s24, %s36
      %p228 = scmp.eq.s32.totalorder %s227, 0
      %s230 = sadd.s32 %s229, 1
      %s231 = scalar_select %p228, %s229, %s230
      %p234 = pneg %p228
      %p235 = scmp.eq.s32.totalorder %s17, 3
      %p236 = por %p234, %p235
      %p237 = scmp.ne.s32.totalorder %s229, %s232
      %p238 = scmp.eq.s32.totalorder %s17, 0
      %p239 = por %p237, %p238
      %p240 = scmp.ne.s32.totalorder %s229, %s232
      %p241 = scmp.eq.s32.totalorder %s22, 3
      %p242 = por %p240, %p241
      %p243 = scmp.ne.s32.totalorder %s232, %s233
      %p244 = scmp.eq.s32.totalorder %s22, 0
      %p245 = por %p243, %p244
      %p246 = scmp.ne.s32.totalorder %s232, %s233
      %p247 = scmp.eq.s32.totalorder %s23, 3
      %p248 = por %p246, %p247
      %p250 = scmp.ne.s32.totalorder %s233, %s249
      %p251 = scmp.eq.s32.totalorder %s23, 0
      %p252 = por %p250, %p251
      %p253 = scmp.le.s32.totalorder 1, %s17
      %p254 = scmp.lt.s32.totalorder %s17, 5
      %p255 = pnand %p253, %p254
      %p256 = pneg %p255
      // Predicated region
      $region9: #{tpu_custom_call.1} parent=5 // pred_check
        _
      $region10: #{tpu_custom_call.1} parent=5 // pred_check_branch
        %258 = sbr.rel (%p255) target = $region12
      $region11: #{tpu_custom_call.1} parent=5 // pred_region
        %s259 = ssub.s32 %s17, 1
        // Predicated region
        $region13: #{tpu_custom_call.1} parent=11 // pred_check
          %p260 = pneg %p156
        $region14: #{tpu_custom_call.1} parent=11 // pred_check_branch
          %262 = sbr.rel (%p260) target = $region16
        $region15: #{tpu_custom_call.1} parent=11 // pred_region
          _
        $region16: #{tpu_custom_call.1} parent=11 // pred_fallthru
          _
        // Predicated region
        $region17: #{tpu_custom_call.1} parent=11 // pred_check
          %p263 = pneg %p177
        $region18: #{tpu_custom_call.1} parent=11 // pred_check_branch
          %265 = sbr.rel (%p263) target = $region20
        $region19: #{tpu_custom_call.1} parent=11 // pred_region
          _
        $region20: #{tpu_custom_call.1} parent=11 // pred_fallthru
          _
        // Predicated region
        $region21: #{tpu_custom_call.1} parent=11 // pred_check
          %p266 = pneg %p198
        $region22: #{tpu_custom_call.1} parent=11 // pred_check_branch
          %268 = sbr.rel (%p266) target = $region24
        $region23: #{tpu_custom_call.1} parent=11 // pred_region
          _
        $region24: #{tpu_custom_call.1} parent=11 // pred_fallthru
          _
        // Predicated region
        $region25: #{tpu_custom_call.1} parent=11 // pred_check
          %p269 = pneg %p219
        $region26: #{tpu_custom_call.1} parent=11 // pred_check_branch
          %271 = sbr.rel (%p269) target = $region28
        $region27: #{tpu_custom_call.1} parent=11 // pred_region
          _
        $region28: #{tpu_custom_call.1} parent=11 // pred_fallthru
          _
      $region12: #{tpu_custom_call.1} parent=5 // pred_fallthru
        _
      %p272 = scmp.lt.s32.totalorder %s17, 4
      // Predicated region
      $region29: #{tpu_custom_call.1} parent=5 // pred_check
        %p273 = pneg %p272
      $region30: #{tpu_custom_call.1} parent=5 // pred_check_branch
        %275 = sbr.rel (%p273) target = $region32
      $region31: #{tpu_custom_call.1} parent=5 // pred_region
        // Predicated region
        $region33: #{tpu_custom_call.1} parent=31 // pred_check
          %p276 = pneg %p49
        $region34: #{tpu_custom_call.1} parent=31 // pred_check_branch
          %278 = sbr.rel (%p276) target = $region36
        $region35: #{tpu_custom_call.1} parent=31 // pred_region
          %p279 = scmp.lt.s32.totalorder %s24, 1
          %s280 = scalar_select %p279, %s24, 1
          %s281 = smul.addr %s280, 4
          %s282 = scalar_lea.vmem %s0, %s281
        $region36: #{tpu_custom_call.1} parent=31 // pred_fallthru
          _
        // Predicated region
        $region37: #{tpu_custom_call.1} parent=31 // pred_check
          %p283 = pneg %p75
        $region38: #{tpu_custom_call.1} parent=31 // pred_check_branch
          %285 = sbr.rel (%p283) target = $region40
        $region39: #{tpu_custom_call.1} parent=31 // pred_region
          %p286 = scmp.lt.s32.totalorder %s24, 1
          %s287 = scalar_select %p286, %s24, 1
          %s288 = smul.addr %s287, 4
          %s289 = smul.addr %s288, 4
          %s290 = scalar_lea.vmem %s1, %s289
        $region40: #{tpu_custom_call.1} parent=31 // pred_fallthru
          _
        // Predicated region
        $region41: #{tpu_custom_call.1} parent=31 // pred_check
          %p291 = pneg %p101
        $region42: #{tpu_custom_call.1} parent=31 // pred_check_branch
          %293 = sbr.rel (%p291) target = $region44
        $region43: #{tpu_custom_call.1} parent=31 // pred_region
          %p294 = scmp.lt.s32.totalorder %s24, 1
          %s295 = scalar_select %p294, %s24, 1
          %s296 = scalar_lea.vmem %s2, %s295
        $region44: #{tpu_custom_call.1} parent=31 // pred_fallthru
          _
        // Predicated region
        $region45: #{tpu_custom_call.1} parent=31 // pred_check
          %p297 = pneg %p129
        $region46: #{tpu_custom_call.1} parent=31 // pred_check_branch
          %299 = sbr.rel (%p297) target = $region48
        $region47: #{tpu_custom_call.1} parent=31 // pred_region
          %p300 = scmp.lt.s32.totalorder %s24, 1
          %s301 = scalar_select %p300, %s24, 1
          %p302 = scmp.lt.s32.totalorder %s25, 1
          %s303 = scalar_select %p302, %s25, 1
          %s304 = smul.addr %s301, 2
          %s305 = sadd.s32 %s303, %s304
          %s306 = smul.addr %s305, 4
          %s307 = scalar_lea.vmem %s3, %s306
        $region48: #{tpu_custom_call.1} parent=31 // pred_fallthru
          _
      $region32: #{tpu_custom_call.1} parent=5 // pred_fallthru
        _
      %p308 = scmp.le.s32.totalorder 1, %s17
      %p309 = scmp.lt.s32.totalorder %s17, 5
      %p310 = pnand %p308, %p309
      %p311 = pneg %p310
      // Predicated region
      $region49: #{tpu_custom_call.1} parent=5 // pred_check
        _
      $region50: #{tpu_custom_call.1} parent=5 // pred_check_branch
        %313 = sbr.rel (%p310) target = $region52
      $region51: #{tpu_custom_call.1} parent=5 // pred_region
        %s314 = ssub.s32 %s17, 1
        %p315 = scmp.lt.s32.totalorder %s26, 1
        %s316 = scalar_select %p315, %s26, 1
        %s317 = smul.addr %s316, 4
        %s318 = scalar_lea.vmem %s0, %s317
        %p319 = pneg %p55
        %p320 = pneg %p52
        %p321 = scmp.lt.s32.totalorder %s26, 1
        %s322 = scalar_select %p321, %s26, 1
        %s323 = smul.addr %s322, 4
        %s324 = smul.addr %s323, 4
        %s325 = scalar_lea.vmem %s1, %s324
        %p326 = pneg %p81
        %p327 = pneg %p78
        %p328 = scmp.lt.s32.totalorder %s26, 1
        %s329 = scalar_select %p328, %s26, 1
        %s330 = scalar_lea.vmem %s2, %s329
        %p331 = pneg %p107
        %p332 = pneg %p104
        %p333 = scmp.lt.s32.totalorder %s26, 1
        %s334 = scalar_select %p333, %s26, 1
        %p335 = scmp.lt.s32.totalorder %s27, 1
        %s336 = scalar_select %p335, %s27, 1
        %s337 = smul.addr %s334, 2
        %s338 = sadd.s32 %s336, %s337
        %s339 = smul.addr %s338, 4
        %s340 = scalar_lea.vmem %s3, %s339
        %p341 = pneg %p135
        %p342 = pneg %p132
        %p343 = pneg %p156
        %p344 = pneg %p153
        %p345 = pneg %p177
        %p346 = pneg %p174
        %p347 = pneg %p198
        %p348 = pneg %p195
        %p349 = pneg %p219
        %p350 = pneg %p216
        %p351 = pneg %p245
        %p352 = pneg %p242
        %s353 = sand.u32 %s232, 1
        %s354 = scalar_lea.sflag [#allocation5], %s353
        %s355 = sand.u32 %s232, 1
        %s356 = smul.addr %s355, 8
        %s357 = scalar_lea.vmem [#allocation4], %s356
        %p358 = scmp.lt.s32.totalorder %s26, 1
        %s359 = scalar_select %p358, %s26, 1
        %s360 = smul.addr %s359, 4
        %s361 = scalar_lea.vmem %s0, %s360
        %p362 = scmp.lt.s32.totalorder %s26, 1
        %s363 = scalar_select %p362, %s26, 1
        %s364 = smul.addr %s363, 4
        %s365 = smul.addr %s364, 4
        %s366 = scalar_lea.vmem %s1, %s365
        %p367 = scmp.lt.s32.totalorder %s26, 1
        %s368 = scalar_select %p367, %s26, 1
        %s369 = scalar_lea.vmem %s2, %s368
        %p370 = scmp.lt.s32.totalorder %s26, 1
        %s371 = scalar_select %p370, %s26, 1
        %p372 = scmp.lt.s32.totalorder %s27, 1
        %s373 = scalar_select %p372, %s27, 1
        %s374 = smul.addr %s371, 2
        %s375 = sadd.s32 %s373, %s374
        %s376 = smul.addr %s375, 4
        %s377 = scalar_lea.vmem %s3, %s376
        %p379 = scmp.eq.s32.totalorder %s27, 0
        // Predicated region
        $region53: #{tpu_custom_call.1} parent=51 // pred_check
          %p380 = pneg %p379
        $region54: #{tpu_custom_call.1} parent=51 // pred_check_branch
          %382 = sbr.rel (%p380) target = $region56
        $region55: #{tpu_custom_call.1} parent=51 // pred_region
          %v383 = vld [vmem:[%s5] sm:$0xf]
          %v384 = vld [vmem:[%s5 + $0x4] sm:$0xf]
          %v385 = vld [vmem:[%s5 + $0x8] sm:$0xf]
          %v386 = vld [vmem:[%s5 + $0xc] sm:$0xf]
          %v387 = vld [vmem:[%s5 + $0x10] sm:$0xf]
          %v388 = vld [vmem:[%s5 + $0x14] sm:$0xf]
          %v389 = vld [vmem:[%s5 + $0x18] sm:$0xf]
          %v390 = vld [vmem:[%s5 + $0x1c] sm:$0xf]
          %v391 = vld [vmem:[%s366] sm:$0xf]
          %v392 = vld [vmem:[%s366 + $0x4] sm:$0xf]
          %v393 = vld [vmem:[%s366 + $0x8] sm:$0xf]
          %v394 = vld [vmem:[%s366 + $0xc] sm:$0xf]
          %v403 = vunpack.c.l.b16 %v383
          %v404 = vunpack.c.l.b16 %v384
          %v405 = vunpack.c.l.b16 %v385
          %v406 = vunpack.c.l.b16 %v386
          %v407 = vunpack.c.l.b16 %v387
          %v408 = vunpack.c.l.b16 %v388
          %v409 = vunpack.c.l.b16 %v389
          %v410 = vunpack.c.l.b16 %v390
          %v411 = vpack.c.b16 %v404, %v403
          %v412 = vpack.c.b16 %v406, %v405
          %v413 = vpack.c.b16 %v408, %v407
          %v414 = vpack.c.b16 %v410, %v409
          %v419 = vunpack.c.l.b16 %v391
          %v420 = vunpack.c.l.b16 %v392
          %v421 = vunpack.c.l.b16 %v393
          %v422 = vunpack.c.l.b16 %v394
          %v423 = vpack.c.b16 %v420, %v419
          %v424 = vpack.c.b16 %v422, %v421
          %vm427 = vcmask 261120
          %v429 = vsel %vm427, %v411, 0
          %v432 = vsel %vm427, %v412, 0
          %v435 = vsel %vm427, %v413, 0
          %v438 = vsel %vm427, %v414, 0
          %440 = vmatprep.subr.bf16.mxu0 0
          %441 = vmatpush1.bf16.msra.mxu0 0
          %442 = vmatprep.subr.bf16.mxu0 0
          %443 = vmatpush1.bf16.msra.mxu0 0
          %444 = vmatprep.subr.bf16.mxu0 0
          %445 = vmatpush1.bf16.msra.mxu0 0
          %446 = vmatprep.subr.bf16.mxu0 0
          %447 = vmatpush1.bf16.msra.mxu0 0
          %448 = vmatprep.subr.bf16.mxu0 0
          %449 = vmatpush1.bf16.msra.mxu0 0
          %450 = vmatprep.subr.bf16.mxu0 0
          %451 = vmatpush1.bf16.msra.mxu0 0
          %452 = vmatprep.subr.bf16.mxu0 0
          %453 = vmatpush1.bf16.msra.mxu0 %v424
          %454 = vmatprep.subr.bf16.mxu0 0
          %455 = vmatpush1.bf16.msra.mxu0 %v423
          %456 = vmatprep.subr.bf16.mxu0 0
          %457 = vmatpush2.bf16.msra.mxu0 0
          %458 = vmatprep.subr.bf16.mxu0 0
          %459 = vmatpush2.bf16.msra.mxu0 0
          %460 = vmatprep.subr.bf16.mxu0 0
          %461 = vmatpush2.bf16.msra.mxu0 0
          %462 = vmatprep.subr.bf16.mxu0 0
          %463 = vmatpush2.bf16.msra.mxu0 0
          %464 = vmatprep.subr.bf16.mxu0 0
          %465 = vmatpush2.bf16.msra.mxu0 0
          %466 = vmatprep.subr.bf16.mxu0 0
          %467 = vmatpush2.bf16.msra.mxu0 0
          %468 = vmatprep.subr.bf16.mxu0 0
          %469 = vmatpush2.bf16.msra.mxu0 0
          %470 = vmatprep.subr.bf16.mxu0 0
          %471 = vmatpush2.bf16.msra.mxu0 0
          %472 = vmatprep.mubr.bf16.mxu0 0
          %473 = vmatmul.mubr.bf16.gmra.mxu0 %v429
          %v474 = vpop.f32.mrf.mxu0
          %v475 = vadd.f32 0.0, %v474
          %v476 = vpop.f32.mrf.mxu0
          %v477 = vpop.f32.mrf.mxu0
          %v478 = vadd.f32 0.0, %v477
          %v479 = vpop.f32.mrf.mxu0
          %480 = vmatprep.mubr.bf16.mxu0 0
          %481 = vmatmul.mubr.bf16.gmra.mxu0 %v432
          %v482 = vpop.f32.mrf.mxu0
          %v483 = vadd.f32 0.0, %v482
          %v484 = vpop.f32.mrf.mxu0
          %v485 = vpop.f32.mrf.mxu0
          %v486 = vadd.f32 0.0, %v485
          %v487 = vpop.f32.mrf.mxu0
          %488 = vmatprep.mubr.bf16.mxu0 0
          %489 = vmatmul.mubr.bf16.gmra.mxu0 %v435
          %v490 = vpop.f32.mrf.mxu0
          %v491 = vadd.f32 0.0, %v490
          %v492 = vpop.f32.mrf.mxu0
          %v493 = vpop.f32.mrf.mxu0
          %v494 = vadd.f32 0.0, %v493
          %v495 = vpop.f32.mrf.mxu0
          %496 = vmatprep.mubr.bf16.mxu0 0
          %497 = vmatmul.mubr.bf16.gmra.mxu0 %v438
          %v498 = vpop.f32.mrf.mxu0
          %v499 = vadd.f32 0.0, %v498
          %v500 = vpop.f32.mrf.mxu0
          %v501 = vpop.f32.mrf.mxu0
          %v502 = vadd.f32 0.0, %v501
          %v503 = vpop.f32.mrf.mxu0
          %504 = vdwg.mxu0
          %v505 = vpack.c.bf16 %v478, %v475
          %v506 = vpack.c.bf16 %v486, %v483
          %v507 = vpack.c.bf16 %v494, %v491
          %v508 = vpack.c.bf16 %v502, %v499
          %v513 = vunpack.c.l.b16 %v505
          %v514 = vunpack.c.h.b16 %v505
          %v515 = vunpack.c.l.b16 %v506
          %v516 = vunpack.c.h.b16 %v506
          %v517 = vunpack.c.l.b16 %v507
          %v518 = vunpack.c.h.b16 %v507
          %v519 = vunpack.c.l.b16 %v508
          %v520 = vunpack.c.h.b16 %v508
          %v521 = vpack.c.b16 %v513, %v513
          %v522 = vpack.c.b16 %v514, %v514
          %v523 = vpack.c.b16 %v515, %v515
          %v524 = vpack.c.b16 %v516, %v516
          %v525 = vpack.c.b16 %v517, %v517
          %v526 = vpack.c.b16 %v518, %v518
          %v527 = vpack.c.b16 %v519, %v519
          %v528 = vpack.c.b16 %v520, %v520
          %vm537 = vcmask 60416
          %538 = vst.msk [vmem:[#allocation2] sm:$0xf] %vm537, %v521
          %539 = vst.msk [vmem:[#allocation2 + $0x4] sm:$0xf] %vm537, %v522
          %540 = vst.msk [vmem:[#allocation2 + $0x8] sm:$0xf] %vm537, %v523
          %541 = vst.msk [vmem:[#allocation2 + $0xc] sm:$0xf] %vm537, %v524
          %542 = vst.msk [vmem:[#allocation2 + $0x10] sm:$0xf] %vm537, %v525
          %543 = vst.msk [vmem:[#allocation2 + $0x14] sm:$0xf] %vm537, %v526
          %544 = vst.msk [vmem:[#allocation2 + $0x18] sm:$0xf] %vm537, %v527
          %545 = vst.msk [vmem:[#allocation2 + $0x1c] sm:$0xf] %vm537, %v528
        $region56: #{tpu_custom_call.1} parent=51 // pred_fallthru
          _
        %s546 = smul.u32 %s27, 16
        %s547 = sshra.s32 %s546, 3
        %s548 = sand.u32 %s546, 7
        %s549 = smul.addr %s547, 4
        %s550 = scalar_lea.vmem [#allocation2], %s549
        %v551 = vld [vmem:[%s550] sm:$0xf]
        %v552 = vld [vmem:[%s550 + $0x4] sm:$0xf]
        %s553 = sadd.s32 %s546, 32
        %s554 = sshra.s32 %s553, 3
        %s555 = sand.u32 %s553, 7
        %s556 = smul.addr %s554, 4
        %s557 = scalar_lea.vmem [#allocation2], %s556
        %v558 = vld [vmem:[%s557] sm:$0xf]
        %v559 = vld [vmem:[%s557 + $0x4] sm:$0xf]
        %v560 = vld [vmem:[%s361] sm:$0xf]
        %s561 = smul.u32 %s27, 4
        %s562 = smul.addr %s561, 4
        %s563 = scalar_lea.vmem %s4, %s562
        %v564 = vld [vmem:[%s563] sm:$0xf]
        %v565 = vld [vmem:[%s563 + $0x4] sm:$0xf]
        %v566 = vld [vmem:[%s563 + $0x8] sm:$0xf]
        %v567 = vld [vmem:[%s563 + $0xc] sm:$0xf]
        %v572 = vunpack.c.l.b16 %v564
        %v573 = vunpack.c.l.b16 %v565
        %v574 = vunpack.c.l.b16 %v566
        %v575 = vunpack.c.l.b16 %v567
        %v576 = vpack.c.b16 %v573, %v572
        %v577 = vpack.c.b16 %v575, %v574
        %vm580 = vcmask 261120
        %v582 = vsel %vm580, %v560, 0
        %584 = vmatprep.subr.bf16.mxu0 0
        %585 = vmatpush1.bf16.msra.mxu0 0
        %586 = vmatprep.subr.bf16.mxu0 0
        %587 = vmatpush1.bf16.msra.mxu0 0
        %588 = vmatprep.subr.bf16.mxu0 0
        %589 = vmatpush1.bf16.msra.mxu0 0
        %590 = vmatprep.subr.bf16.mxu0 0
        %591 = vmatpush1.bf16.msra.mxu0 0
        %592 = vmatprep.subr.bf16.mxu0 0
        %593 = vmatpush1.bf16.msra.mxu0 0
        %594 = vmatprep.subr.bf16.mxu0 0
        %595 = vmatpush1.bf16.msra.mxu0 0
        %596 = vmatprep.subr.bf16.mxu0 0
        %597 = vmatpush1.bf16.msra.mxu0 %v577
        %598 = vmatprep.subr.bf16.mxu0 0
        %599 = vmatpush1.bf16.msra.mxu0 %v576
        %600 = vmatprep.subr.bf16.mxu0 0
        %601 = vmatpush2.bf16.msra.mxu0 0
        %602 = vmatprep.subr.bf16.mxu0 0
        %603 = vmatpush2.bf16.msra.mxu0 0
        %604 = vmatprep.subr.bf16.mxu0 0
        %605 = vmatpush2.bf16.msra.mxu0 0
        %606 = vmatprep.subr.bf16.mxu0 0
        %607 = vmatpush2.bf16.msra.mxu0 0
        %608 = vmatprep.subr.bf16.mxu0 0
        %609 = vmatpush2.bf16.msra.mxu0 0
        %610 = vmatprep.subr.bf16.mxu0 0
        %611 = vmatpush2.bf16.msra.mxu0 0
        %612 = vmatprep.subr.bf16.mxu0 0
        %613 = vmatpush2.bf16.msra.mxu0 0
        %614 = vmatprep.subr.bf16.mxu0 0
        %615 = vmatpush2.bf16.msra.mxu0 0
        %616 = vmatprep.mubr.bf16.mxu0 0
        %617 = vmatmul.mubr.bf16.gmra.mxu0 %v582
        %v618 = vpop.f32.mrf.mxu0
        %v619 = vadd.f32 0.0, %v618
        %v620 = vpop.f32.mrf.mxu0
        %v621 = vpop.f32.mrf.mxu0
        %v622 = vpop.f32.mrf.mxu0
        %623 = vdwg.mxu0
        %v624 = vpack.c.bf16 %v619, %v619
        %v625 = vld [vmem:[%s377] sm:$0xf]
        %v626 = vunpack.c.l.bf16 %v625
        %v629 = vunpack.c.l.b16 %v551
        %v630 = vunpack.c.l.b16 %v552
        %v631 = vpack.c.b16 %v630, %v629
        %vm633 = vcmask 130048
        %v635 = vsel %vm633, %v624, 0
        %637 = vmatprep.subr.bf16.mxu0 0
        %638 = vmatpush1.bf16.msra.mxu0 0
        %639 = vmatprep.subr.bf16.mxu0 0
        %640 = vmatpush1.bf16.msra.mxu0 0
        %641 = vmatprep.subr.bf16.mxu0 0
        %642 = vmatpush1.bf16.msra.mxu0 0
        %643 = vmatprep.subr.bf16.mxu0 0
        %644 = vmatpush1.bf16.msra.mxu0 0
        %645 = vmatprep.subr.bf16.mxu0 0
        %646 = vmatpush1.bf16.msra.mxu0 0
        %647 = vmatprep.subr.bf16.mxu0 0
        %648 = vmatpush1.bf16.msra.mxu0 0
        %649 = vmatprep.subr.bf16.mxu0 0
        %650 = vmatpush1.bf16.msra.mxu0 0
        %651 = vmatprep.subr.bf16.mxu0 0
        %652 = vmatpush1.bf16.msra.mxu0 %v631
        %653 = vmatprep.subr.bf16.mxu0 0
        %654 = vmatpush2.bf16.msra.mxu0 0
        %655 = vmatprep.subr.bf16.mxu0 0
        %656 = vmatpush2.bf16.msra.mxu0 0
        %657 = vmatprep.subr.bf16.mxu0 0
        %658 = vmatpush2.bf16.msra.mxu0 0
        %659 = vmatprep.subr.bf16.mxu0 0
        %660 = vmatpush2.bf16.msra.mxu0 0
        %661 = vmatprep.subr.bf16.mxu0 0
        %662 = vmatpush2.bf16.msra.mxu0 0
        %663 = vmatprep.subr.bf16.mxu0 0
        %664 = vmatpush2.bf16.msra.mxu0 0
        %665 = vmatprep.subr.bf16.mxu0 0
        %666 = vmatpush2.bf16.msra.mxu0 0
        %667 = vmatprep.subr.bf16.mxu0 0
        %668 = vmatpush2.bf16.msra.mxu0 0
        %669 = vmatprep.mubr.bf16.mxu0 0
        %670 = vmatmul.mubr.bf16.gmra.mxu0 %v635
        %v671 = vpop.f32.mrf.mxu0
        %v672 = vadd.f32 %v626, %v671
        %v673 = vpop.f32.mrf.mxu0
        %v674 = vpop.f32.mrf.mxu0
        %v675 = vpop.f32.mrf.mxu0
        %676 = vdwg.mxu0
        %v677 = vld [vmem:[%s369] sm:$0x1]
        %v679 = vlaneseq
        %v680 = vshrl.u32 %v679, 7
        %v681 = vsub.s32 0, %v680
        %v682 = vrot.slane %v677, %v681
        %v684 = vadd.f32 %v672, %v682
        %vm685 = vcmask 64512
        %v686 = vsel %vm685, %v684, -inf
        %687 = vmax.xlane.f32.xlu0 %v686
        %v688 = vpop.xlane.xlu0 %687
        %v689 = vsub.f32 %v684, %v688
        %v690 = vmul.f32 %v689, 1.442695
        %v691 = vpow.pop %v690
        %v692 = vsel %vm685, %v691, 0.0
        %693 = vadd.xlane.f32.xlu0 %v692
        %v694 = vpop.xlane.xlu0 %693
        %v695 = vrcp.pop %v694
        %v696 = vmul.f32 %v691, %v695
        %v697 = vpack.c.bf16 %v696, %v696
        %v700 = vunpack.c.l.b16 %v558
        %v701 = vunpack.c.l.b16 %v559
        %v702 = vpack.c.b16 %v701, %v700
        %v704 = vsel %vm685, %v697, 0
        %v707 = vsel %vm685, %v702, 0
        %709 = vmatprep.subr.bf16.mxu0 0
        %710 = vmatpush1.bf16.xpose.msra.mxu0 0
        %711 = vmatprep.subr.bf16.mxu0 0
        %712 = vmatpush1.bf16.xpose.msra.mxu0 0
        %713 = vmatprep.subr.bf16.mxu0 0
        %714 = vmatpush1.bf16.xpose.msra.mxu0 0
        %715 = vmatprep.subr.bf16.mxu0 0
        %716 = vmatpush1.bf16.xpose.msra.mxu0 0
        %717 = vmatprep.subr.bf16.mxu0 0
        %718 = vmatpush1.bf16.xpose.msra.mxu0 0
        %719 = vmatprep.subr.bf16.mxu0 0
        %720 = vmatpush1.bf16.xpose.msra.mxu0 0
        %721 = vmatprep.subr.bf16.mxu0 0
        %722 = vmatpush1.bf16.xpose.msra.mxu0 0
        %723 = vmatprep.subr.bf16.mxu0 0
        %724 = vmatpush1.bf16.xpose.msra.mxu0 %v707
        %725 = vmatprep.subr.bf16.mxu0 0
        %726 = vmatpush2.bf16.xpose.msra.mxu0 0
        %727 = vmatprep.subr.bf16.mxu0 0
        %728 = vmatpush2.bf16.xpose.msra.mxu0 0
        %729 = vmatprep.subr.bf16.mxu0 0
        %730 = vmatpush2.bf16.xpose.msra.mxu0 0
        %731 = vmatprep.subr.bf16.mxu0 0
        %732 = vmatpush2.bf16.xpose.msra.mxu0 0
        %733 = vmatprep.subr.bf16.mxu0 0
        %734 = vmatpush2.bf16.xpose.msra.mxu0 0
        %735 = vmatprep.subr.bf16.mxu0 0
        %736 = vmatpush2.bf16.xpose.msra.mxu0 0
        %737 = vmatprep.subr.bf16.mxu0 0
        %738 = vmatpush2.bf16.xpose.msra.mxu0 0
        %739 = vmatprep.subr.bf16.mxu0 0
        %740 = vmatpush2.bf16.xpose.msra.mxu0 0
        %741 = vmatprep.mubr.bf16.mxu0 0
        %742 = vmatmul.mubr.bf16.gmra.mxu0 %v704
        %v743 = vpop.f32.mrf.mxu0
        %v744 = vadd.f32 0.0, %v743
        %v745 = vpop.f32.mrf.mxu0
        %v746 = vpop.f32.mrf.mxu0
        %v747 = vpop.f32.mrf.mxu0
        %748 = vdwg.mxu0
        %v749 = vpack.c.bf16 %v744, %v744
        %s750 = smul.addr %s27, 4
        %s751 = scalar_lea.vmem [#allocation3], %s750
        %vm752 = vcmask 125952
        %753 = vst.msk [vmem:[%s751] sm:$0xf] %vm752, %v749
        %p754 = scmp.eq.s32.totalorder %s27, 1
        // Predicated region
        $region57: #{tpu_custom_call.1} parent=51 // pred_check
          %p755 = pneg %p754
        $region58: #{tpu_custom_call.1} parent=51 // pred_check_branch
          %757 = sbr.rel (%p755) target = $region60
        $region59: #{tpu_custom_call.1} parent=51 // pred_region
          %v758 = vld [vmem:[%s7] sm:$0x1]
          %v759 = vld [vmem:[#allocation3] sm:$0xf]
          %v760 = vld [vmem:[%s6] sm:$0xf]
          %v761 = vld [vmem:[%s6 + $0x4] sm:$0xf]
          %v764 = vunpack.c.l.b16 %v760
          %v765 = vunpack.c.l.b16 %v761
          %v766 = vpack.c.b16 %v765, %v764
          %v769 = vsel %vm633, %v759, 0
          %771 = vmatprep.subr.bf16.mxu0 0
          %772 = vmatpush1.bf16.msra.mxu0 0
          %773 = vmatprep.subr.bf16.mxu0 0
          %774 = vmatpush1.bf16.msra.mxu0 0
          %775 = vmatprep.subr.bf16.mxu0 0
          %776 = vmatpush1.bf16.msra.mxu0 0
          %777 = vmatprep.subr.bf16.mxu0 0
          %778 = vmatpush1.bf16.msra.mxu0 0
          %779 = vmatprep.subr.bf16.mxu0 0
          %780 = vmatpush1.bf16.msra.mxu0 0
          %781 = vmatprep.subr.bf16.mxu0 0
          %782 = vmatpush1.bf16.msra.mxu0 0
          %783 = vmatprep.subr.bf16.mxu0 0
          %784 = vmatpush1.bf16.msra.mxu0 0
          %785 = vmatprep.subr.bf16.mxu0 0
          %786 = vmatpush1.bf16.msra.mxu0 %v766
          %787 = vmatprep.subr.bf16.mxu0 0
          %788 = vmatpush2.bf16.msra.mxu0 0
          %789 = vmatprep.subr.bf16.mxu0 0
          %790 = vmatpush2.bf16.msra.mxu0 0
          %791 = vmatprep.subr.bf16.mxu0 0
          %792 = vmatpush2.bf16.msra.mxu0 0
          %793 = vmatprep.subr.bf16.mxu0 0
          %794 = vmatpush2.bf16.msra.mxu0 0
          %795 = vmatprep.subr.bf16.mxu0 0
          %796 = vmatpush2.bf16.msra.mxu0 0
          %797 = vmatprep.subr.bf16.mxu0 0
          %798 = vmatpush2.bf16.msra.mxu0 0
          %799 = vmatprep.subr.bf16.mxu0 0
          %800 = vmatpush2.bf16.msra.mxu0 0
          %801 = vmatprep.subr.bf16.mxu0 0
          %802 = vmatpush2.bf16.msra.mxu0 0
          %803 = vmatprep.mubr.bf16.mxu0 0
          %804 = vmatmul.mubr.bf16.gmra.mxu0 %v769
          %v805 = vpop.f32.mrf.mxu0
          %v806 = vadd.f32 0.0, %v805
          %v807 = vpop.f32.mrf.mxu0
          %v808 = vpop.f32.mrf.mxu0
          %v809 = vpop.f32.mrf.mxu0
          %810 = vdwg.mxu0
          %v812 = vlaneseq
          %v813 = vshrl.u32 %v812, 7
          %v814 = vsub.s32 0, %v813
          %v815 = vrot.slane %v758, %v814
          %v817 = vadd.f32 %v815, %v806
          %s818 = scalar_lea.vmem [#allocation3], 4
          %v819 = vld [vmem:[%s818] sm:$0xf]
          %s820 = scalar_lea.vmem %s6, 8
          %v821 = vld [vmem:[%s820] sm:$0xf]
          %v822 = vld [vmem:[%s820 + $0x4] sm:$0xf]
          %v825 = vunpack.c.l.b16 %v821
          %v826 = vunpack.c.l.b16 %v822
          %v827 = vpack.c.b16 %v826, %v825
          %v830 = vsel %vm633, %v819, 0
          %832 = vmatprep.subr.bf16.mxu0 0
          %833 = vmatpush1.bf16.msra.mxu0 0
          %834 = vmatprep.subr.bf16.mxu0 0
          %835 = vmatpush1.bf16.msra.mxu0 0
          %836 = vmatprep.subr.bf16.mxu0 0
          %837 = vmatpush1.bf16.msra.mxu0 0
          %838 = vmatprep.subr.bf16.mxu0 0
          %839 = vmatpush1.bf16.msra.mxu0 0
          %840 = vmatprep.subr.bf16.mxu0 0
          %841 = vmatpush1.bf16.msra.mxu0 0
          %842 = vmatprep.subr.bf16.mxu0 0
          %843 = vmatpush1.bf16.msra.mxu0 0
          %844 = vmatprep.subr.bf16.mxu0 0
          %845 = vmatpush1.bf16.msra.mxu0 0
          %846 = vmatprep.subr.bf16.mxu0 0
          %847 = vmatpush1.bf16.msra.mxu0 %v827
          %848 = vmatprep.subr.bf16.mxu0 0
          %849 = vmatpush2.bf16.msra.mxu0 0
          %850 = vmatprep.subr.bf16.mxu0 0
          %851 = vmatpush2.bf16.msra.mxu0 0
          %852 = vmatprep.subr.bf16.mxu0 0
          %853 = vmatpush2.bf16.msra.mxu0 0
          %854 = vmatprep.subr.bf16.mxu0 0
          %855 = vmatpush2.bf16.msra.mxu0 0
          %856 = vmatprep.subr.bf16.mxu0 0
          %857 = vmatpush2.bf16.msra.mxu0 0
          %858 = vmatprep.subr.bf16.mxu0 0
          %859 = vmatpush2.bf16.msra.mxu0 0
          %860 = vmatprep.subr.bf16.mxu0 0
          %861 = vmatpush2.bf16.msra.mxu0 0
          %862 = vmatprep.subr.bf16.mxu0 0
          %863 = vmatpush2.bf16.msra.mxu0 0
          %864 = vmatprep.mubr.bf16.mxu0 0
          %865 = vmatmul.mubr.bf16.gmra.mxu0 %v830
          %v866 = vpop.f32.mrf.mxu0
          %v867 = vadd.f32 0.0, %v866
          %v868 = vpop.f32.mrf.mxu0
          %v869 = vpop.f32.mrf.mxu0
          %v870 = vpop.f32.mrf.mxu0
          %871 = vdwg.mxu0
          %v872 = vadd.f32 %v817, %v867
          %873 = vst [vmem:[%s357] sm:$0xff] %v872
        $region60: #{tpu_custom_call.1} parent=51 // pred_fallthru
          _
        %s874 = sand.u32 %s232, 1
        %s875 = scalar_lea.sflag [#allocation5], %s874
        %s876 = sand.u32 %s232, 1
        %s877 = smul.addr %s876, 8
        %s878 = scalar_lea.vmem [#allocation4], %s877
        // Predicated region
        $region61: #{tpu_custom_call.1} parent=51 // pred_check
          %p879 = pneg %p242
        $region62: #{tpu_custom_call.1} parent=51 // pred_check_branch
          %881 = sbr.rel (%p879) target = $region64
        $region63: #{tpu_custom_call.1} parent=51 // pred_region
          %s883 = ssub.s32 128, 128
          %884 = vsyncadd %s875, %s883
          %s885 = smul.addr %s26, 128
          %s886 = scalar_lea.hbm %s8, %s885
          %s888 = sshll.u32 %s878, 4
          %s889 = int_to_ptr.vmem [resolvable:$true] %s888
          %891 = dma.vmem_to_hbm [thread:$0]  %s889, 128, %s886, %s875
        $region64: #{tpu_custom_call.1} parent=51 // pred_fallthru
          _
      $region52: #{tpu_custom_call.1} parent=5 // pred_fallthru
        _
      %p892 = scmp.le.s32.totalorder 2, %s17
      // Predicated region
      $region65: #{tpu_custom_call.1} parent=5 // pred_check
        %p893 = pneg %p892
      $region66: #{tpu_custom_call.1} parent=5 // pred_check_branch
        %895 = sbr.rel (%p893) target = $region68
      $region67: #{tpu_custom_call.1} parent=5 // pred_region
        %s896 = ssub.s32 %s17, 2
        // Predicated region
        $region69: #{tpu_custom_call.1} parent=67 // pred_check
          %p897 = pneg %p248
        $region70: #{tpu_custom_call.1} parent=67 // pred_check_branch
          %899 = sbr.rel (%p897) target = $region72
        $region71: #{tpu_custom_call.1} parent=67 // pred_region
          %s900 = sand.u32 %s233, 1
          %s901 = scalar_lea.sflag [#allocation5], %s900
          %s902 = sand.u32 %s233, 1
          %s903 = smul.addr %s902, 8
          %s904 = scalar_lea.vmem [#allocation4], %s903
          %905 = dma.done %s901, 128
        $region72: #{tpu_custom_call.1} parent=67 // pred_fallthru
          _
      $region68: #{tpu_custom_call.1} parent=5 // pred_fallthru
        _
    $region6: #{tpu_custom_call.1} parent=1 // loop_footer
      %s21 = sadd.s32 1, %s17
    $region7: #{tpu_custom_call.1} parent=1 // loop_footer_branch
      %16 = sbr.rel target = $region3
    $region8: #{tpu_custom_call.1} parent=1 // loop_exit
      _
    %906 = vsyncpa [#allocation5], 1
    %s907 = scalar_lea.sflag [#allocation5], 1
    %908 = vsyncpa %s907, 1

</llo_original>
